<compile_context>
chip_gen: v7x
topology: tpu7x:2x2x1
jax: 0.10.0
libtpu: 0.0.40
codegen_flags: <defaults>
</compile_context>

<pallas_src>
import functools

import jax
import jax.numpy as jnp
from jax.experimental import pallas as pl
from jax.experimental.pallas import tpu as pltpu


def _mlp_tanh_kernel(x_ref, w1_ref, b1_ref, w2_ref, b2_ref, w3_ref, b3_ref, o_ref):
    # x_ref: (1, 64, T) f32/bf16; w1,w2: (64,64) bf16; b1,b2: (64,1) f32;
    # w3: (8,64) bf16 (rows 1..7 are zero padding); b3: (1,) f32 in SMEM;
    # o_ref: (1, 1, T) f32.
    x = x_ref[0].astype(jnp.bfloat16)                                  # (64, T)
    h1 = jnp.tanh(
        jnp.dot(w1_ref[...], x, preferred_element_type=jnp.float32) + b1_ref[...]
    ).astype(jnp.bfloat16)                                             # (64, T) bf16
    h2 = jnp.tanh(
        jnp.dot(w2_ref[...], h1, preferred_element_type=jnp.float32) + b2_ref[...]
    ).astype(jnp.bfloat16)                                             # (64, T) bf16
    # conv3 on the MXU: bf16 in, f32 accumulate.  Only row 0 of w3 is real.
    y = jnp.dot(w3_ref[...], h2, preferred_element_type=jnp.float32)   # (8, T)
    o_ref[0] = jnp.tanh(y[0:1, :] + b3_ref[0])                         # (1, T)


@functools.partial(jax.jit, static_argnames=("max_tile_hw",))
def model_tanh_forward(x_nchw, params, *, max_tile_hw=8192):
    """x_nchw: (N, 64, H, W) float32 (or bfloat16) -> (N, 1, H, W) float32."""
    assert max_tile_hw % 128 == 0
    w1, b1, w2, b2, w3, b3 = params
    n, c, h, w = x_nchw.shape
    assert c == 64
    hw = h * w
    # Free reshape: channels stay on the sublane axis, pixels become the lane axis.
    x_rows = x_nchw.reshape(n, c, hw)

    # Tile selection -- no wrapper-side padding of x (saves a full HBM pass).
    if hw <= max_tile_hw:
        tile_hw = hw          # full-extent pixel block: always a legal block shape
        num_tiles = 1
        # Keep >= 2 grid steps so both v7x TensorCores get work when possible.
        if n * num_tiles < 2 and hw >= 256 and hw % 256 == 0:
            tile_hw = hw // 2
            num_tiles = 2
    else:
        tile_hw = max_tile_hw                 # multiple of 128; last block may be partial
        num_tiles = pl.cdiv(hw, tile_hw)      # partial trailing block: write is masked

    # Zero-pad w3 (1,64) -> (8,64) so the final matmul has sublane-aligned M.
    w3_pad = jnp.zeros((8, 64), jnp.float32).at[0:1, :].set(w3)

    out = pl.pallas_call(
        _mlp_tanh_kernel,
        out_shape=jax.ShapeDtypeStruct((n, 1, hw), jnp.float32),
        grid=(n, num_tiles),
        in_specs=[
            pl.BlockSpec((1, 64, tile_hw), lambda i, t: (i, 0, t)),   # x tile
            pl.BlockSpec((64, 64), lambda i, t: (0, 0)),              # w1 (resident)
            pl.BlockSpec((64, 1), lambda i, t: (0, 0)),               # b1
            pl.BlockSpec((64, 64), lambda i, t: (0, 0)),              # w2
            pl.BlockSpec((64, 1), lambda i, t: (0, 0)),               # b2
            pl.BlockSpec((8, 64), lambda i, t: (0, 0)),               # w3 (padded)
            pl.BlockSpec(memory_space=pltpu.MemorySpace.SMEM),        # b3 scalar
        ],
        out_specs=pl.BlockSpec((1, 1, tile_hw), lambda i, t: (i, 0, t)),
        compiler_params=pltpu.CompilerParams(
            dimension_semantics=("parallel", "parallel"),
            vmem_limit_bytes=48 * 1024 * 1024,
        ),
    )(
        x_rows,
        w1.astype(jnp.bfloat16), b1,
        w2.astype(jnp.bfloat16), b2,
        w3_pad.astype(jnp.bfloat16), b3,
    )

    return out.reshape(n, 1, h, w)


def init_params(key):
    """Deterministic init mirroring Conv2d(64,64,1), Conv2d(64,64,1), Conv2d(64,1,1).

    Weights are stored in the native PyTorch (out, in) layout (kernel size 1 is
    squeezed); biases b1/b2 are (out, 1) columns, b3 is a (1,) scalar."""
    k1, k2, k3, k4, k5, k6 = jax.random.split(key, 6)
    s = 1.0 / jnp.sqrt(64.0)  # kaiming-uniform-ish bound for fan_in=64, k=1
    w1 = jax.random.uniform(k1, (64, 64), jnp.float32, -s, s)
    b1 = jax.random.uniform(k2, (64, 1), jnp.float32, -s, s)
    w2 = jax.random.uniform(k3, (64, 64), jnp.float32, -s, s)
    b2 = jax.random.uniform(k4, (64, 1), jnp.float32, -s, s)
    w3 = jax.random.uniform(k5, (1, 64), jnp.float32, -s, s)
    b3 = jax.random.uniform(k6, (1,), jnp.float32, -s, s)
    return (w1, b1, w2, b2, w3, b3)


def reference_forward(x_nchw, params):
    """Pure-JAX f32 reference (1x1 conv == channel matmul chain)."""
    w1, b1, w2, b2, w3, b3 = params
    n, c, h, w = x_nchw.shape
    x = x_nchw.reshape(n, c, h * w)
    h1 = jnp.tanh(jnp.einsum("oi,nip->nop", w1, x) + b1[None])
    h2 = jnp.tanh(jnp.einsum("oi,nip->nop", w2, h1) + b2[None])
    y = jnp.tanh(jnp.einsum("oi,nip->nop", w3, h2) + b3[None, :, None])
    return y.reshape(n, 1, h, w)


if __name__ == "__main__":
    key = jax.random.PRNGKey(0)
    kx, kx2, kp = jax.random.split(key, 3)
    params = init_params(kp)

    # Small-but-real spatial case (exercises the tiled, lane-aligned path).
    x = jax.random.normal(kx, (2, 64, 16, 16), dtype=jnp.float32)
    out = jax.block_until_ready(model_tanh_forward(x, params))
    ref = reference_forward(x, params)
    assert out.shape == (2, 1, 16, 16), out.shape
    assert jnp.max(jnp.abs(out - ref)) < 3e-2, float(jnp.max(jnp.abs(out - ref)))

    # The module's own example shape: (1, 64, 1, 1) (full-extent tiny block).
    x1 = jax.random.normal(kx2, (1, 64, 1, 1), dtype=jnp.float32)
    out1 = jax.block_until_ready(model_tanh_forward(x1, params))
    ref1 = reference_forward(x1, params)
    assert out1.shape == (1, 1, 1, 1), out1.shape
    assert jnp.max(jnp.abs(out1 - ref1)) < 3e-2, float(jnp.max(jnp.abs(out1 - ref1)))

    print("KERNEL_OK")
</pallas_src>

<mosaic_0001>
module attributes {stable_mosaic.version = 11 : i64} {
  func.func @_mlp_tanh_kernel(%arg0: i32, %arg1: i32, %arg2: memref<1x64x256xf32, #tpu.memory_space<vmem>>, %arg3: memref<64x64xbf16, #tpu.memory_space<vmem>>, %arg4: memref<64x1xf32, #tpu.memory_space<vmem>>, %arg5: memref<64x64xbf16, #tpu.memory_space<vmem>>, %arg6: memref<64x1xf32, #tpu.memory_space<vmem>>, %arg7: memref<8x64xbf16, #tpu.memory_space<vmem>>, %arg8: memref<1xf32, #tpu.memory_space<smem>>, %arg9: memref<1x1x256xf32, #tpu.memory_space<vmem>>) attributes {dimension_semantics = [#tpu.dimension_semantics<parallel>, #tpu.dimension_semantics<parallel>], iteration_bounds = array<i64: 2, 1>, scalar_prefetch = 0 : i64, scratch_operands = 0 : i64, tpu.core_type = #tpu.core_type<tc>, window_params = [{transform_indices = @transform_0, window_bounds = array<i64: 1, 64, 256>}, {pipeline_mode = #tpu.pipeline_mode<synchronous>, transform_indices = @transform_1, window_bounds = array<i64: 64, 64>}, {pipeline_mode = #tpu.pipeline_mode<synchronous>, transform_indices = @transform_2, window_bounds = array<i64: 64, 1>}, {pipeline_mode = #tpu.pipeline_mode<synchronous>, transform_indices = @transform_3, window_bounds = array<i64: 64, 64>}, {pipeline_mode = #tpu.pipeline_mode<synchronous>, transform_indices = @transform_4, window_bounds = array<i64: 64, 1>}, {pipeline_mode = #tpu.pipeline_mode<synchronous>, transform_indices = @transform_5, window_bounds = array<i64: 8, 64>}, {transform_indices = @transform_6, window_bounds = array<i64: 1>}, {transform_indices = @transform_7, window_bounds = array<i64: 1, 1, 256>}]} {
    %c0 = arith.constant 0 : index
    %c0_0 = arith.constant 0 : index
    %c0_1 = arith.constant 0 : index
    %0 = vector.load %arg2[%c0, %c0_0, %c0_1] : memref<1x64x256xf32, #tpu.memory_space<vmem>>, vector<1x64x256xf32>
    %1 = vector.shape_cast %0 : vector<1x64x256xf32> to vector<64x256xf32>
    %2 = arith.truncf %1 : vector<64x256xf32> to vector<64x256xbf16>
    %c0_2 = arith.constant 0 : index
    %c0_3 = arith.constant 0 : index
    %3 = vector.load %arg3[%c0_2, %c0_3] : memref<64x64xbf16, #tpu.memory_space<vmem>>, vector<64x64xbf16>
    %cst = arith.constant dense<0.000000e+00> : vector<64x256xf32>
    %4 = tpu.matmul %3, %2, %cst {dimension_numbers = #tpu.dot_dimension_numbers<[1], [0], [0], [1], [0, 0, 1, 1], [], []>} : vector<64x64xbf16>, vector<64x256xbf16>, vector<64x256xf32> -> vector<64x256xf32>
    %c0_4 = arith.constant 0 : index
    %c0_5 = arith.constant 0 : index
    %5 = vector.load %arg4[%c0_4, %c0_5] : memref<64x1xf32, #tpu.memory_space<vmem>>, vector<64x1xf32>
    %6 = vector.broadcast %5 : vector<64x1xf32> to vector<64x256xf32>
    %7 = arith.addf %4, %6 : vector<64x256xf32>
    %8 = math.tanh %7 : vector<64x256xf32>
    %9 = arith.truncf %8 : vector<64x256xf32> to vector<64x256xbf16>
    %c0_6 = arith.constant 0 : index
    %c0_7 = arith.constant 0 : index
    %10 = vector.load %arg5[%c0_6, %c0_7] : memref<64x64xbf16, #tpu.memory_space<vmem>>, vector<64x64xbf16>
    %cst_8 = arith.constant dense<0.000000e+00> : vector<64x256xf32>
    %11 = tpu.matmul %10, %9, %cst_8 {dimension_numbers = #tpu.dot_dimension_numbers<[1], [0], [0], [1], [0, 0, 1, 1], [], []>} : vector<64x64xbf16>, vector<64x256xbf16>, vector<64x256xf32> -> vector<64x256xf32>
    %c0_9 = arith.constant 0 : index
    %c0_10 = arith.constant 0 : index
    %12 = vector.load %arg6[%c0_9, %c0_10] : memref<64x1xf32, #tpu.memory_space<vmem>>, vector<64x1xf32>
    %13 = vector.broadcast %12 : vector<64x1xf32> to vector<64x256xf32>
    %14 = arith.addf %11, %13 : vector<64x256xf32>
    %15 = math.tanh %14 : vector<64x256xf32>
    %16 = arith.truncf %15 : vector<64x256xf32> to vector<64x256xbf16>
    %c0_11 = arith.constant 0 : index
    %c0_12 = arith.constant 0 : index
    %17 = vector.load %arg7[%c0_11, %c0_12] : memref<8x64xbf16, #tpu.memory_space<vmem>>, vector<8x64xbf16>
    %cst_13 = arith.constant dense<0.000000e+00> : vector<8x256xf32>
    %18 = tpu.matmul %17, %16, %cst_13 {dimension_numbers = #tpu.dot_dimension_numbers<[1], [0], [0], [1], [0, 0, 1, 1], [], []>} : vector<8x64xbf16>, vector<64x256xbf16>, vector<8x256xf32> -> vector<8x256xf32>
    %19 = vector.extract_strided_slice %18 {offsets = [0, 0], sizes = [1, 256], strides = [1, 1]} : vector<8x256xf32> to vector<1x256xf32>
    %c0_14 = arith.constant 0 : index
    %20 = memref.load %arg8[%c0_14] : memref<1xf32, #tpu.memory_space<smem>>
    %21 = vector.broadcast %20 : f32 to vector<1x256xf32>
    %22 = arith.addf %19, %21 : vector<1x256xf32>
    %23 = math.tanh %22 : vector<1x256xf32>
    %c0_15 = arith.constant 0 : index
    %c0_16 = arith.constant 0 : index
    %c0_17 = arith.constant 0 : index
    %24 = vector.load %arg9[%c0_15, %c0_16, %c0_17] : memref<1x1x256xf32, #tpu.memory_space<vmem>>, vector<1x1x256xf32>
    %25 = vector.shape_cast %24 : vector<1x1x256xf32> to vector<1x256xf32>
    %26 = vector.shape_cast %23 : vector<1x256xf32> to vector<1x1x256xf32>
    tpu.vector_store %arg9[%c0_15, %c0_16, %c0_17], %26 {strides = array<i32>} : memref<1x1x256xf32, #tpu.memory_space<vmem>>, vector<1x1x256xf32>,
    return
  }
  func.func @transform_0(%arg0: i32, %arg1: i32) -> (i32, i32, i32) {
    %c0_i32 = arith.constant 0 : i32
    %c0_i32_0 = arith.constant 0 : i32
    return %arg0, %c0_i32, %arg1 : i32, i32, i32
  }
  func.func @transform_1(%arg0: i32, %arg1: i32) -> (i32, i32) {
    %c0_i32 = arith.constant 0 : i32
    %c0_i32_0 = arith.constant 0 : i32
    %c0_i32_1 = arith.constant 0 : i32
    return %c0_i32, %c0_i32_0 : i32, i32
  }
  func.func @transform_2(%arg0: i32, %arg1: i32) -> (i32, i32) {
    %c0_i32 = arith.constant 0 : i32
    %c0_i32_0 = arith.constant 0 : i32
    %c0_i32_1 = arith.constant 0 : i32
    return %c0_i32, %c0_i32_0 : i32, i32
  }
  func.func @transform_3(%arg0: i32, %arg1: i32) -> (i32, i32) {
    %c0_i32 = arith.constant 0 : i32
    %c0_i32_0 = arith.constant 0 : i32
    %c0_i32_1 = arith.constant 0 : i32
    return %c0_i32, %c0_i32_0 : i32, i32
  }
  func.func @transform_4(%arg0: i32, %arg1: i32) -> (i32, i32) {
    %c0_i32 = arith.constant 0 : i32
    %c0_i32_0 = arith.constant 0 : i32
    %c0_i32_1 = arith.constant 0 : i32
    return %c0_i32, %c0_i32_0 : i32, i32
  }
  func.func @transform_5(%arg0: i32, %arg1: i32) -> (i32, i32) {
    %c0_i32 = arith.constant 0 : i32
    %c0_i32_0 = arith.constant 0 : i32
    %c0_i32_1 = arith.constant 0 : i32
    return %c0_i32, %c0_i32_0 : i32, i32
  }
  func.func @transform_6(%arg0: i32, %arg1: i32) -> i32 {
    %c0_i32 = arith.constant 0 : i32
    %c0_i32_0 = arith.constant 0 : i32
    return %c0_i32 : i32
  }
  func.func @transform_7(%arg0: i32, %arg1: i32) -> (i32, i32, i32) {
    %c0_i32 = arith.constant 0 : i32
    %c0_i32_0 = arith.constant 0 : i32
    return %arg0, %c0_i32, %arg1 : i32, i32, i32
  }
}

</mosaic_0001>

<llo_original>
// kernel: model_tanh_forward.1
$region0: #{model_tanh_forward.1}
  #allocation0 [shape = 'u32[]', space=smem, size = 0x4, offset = 0x4, fixed_abs, tag = 'smem constant byte address 0x4 - core index']
  #allocation1 [shape = 'u32[144,128]{1,0:T(1,128)}', space=vmem, size = 0x12000, scoped, tag = 'internal scratch']
  #allocation2 [shape = 'f32[1]{0:T(128)S(6)}', space=smem, size = 0x200, scoped, tag = 'scoped memory for model_tanh_forward.1']
  %s0 = inlined_call_operand.vmem [shape: f32[2,64,256], index: 0, kind: input, shape index: {}]
  %s1 = inlined_call_operand.vmem [shape: bf16[64,64], index: 1, kind: input, shape index: {}]
  %s2 = inlined_call_operand.vmem [shape: f32[64,1], index: 2, kind: input, shape index: {}]
  %s3 = inlined_call_operand.vmem [shape: bf16[64,64], index: 3, kind: input, shape index: {}]
  %s4 = inlined_call_operand.vmem [shape: f32[64,1], index: 4, kind: input, shape index: {}]
  %s5 = inlined_call_operand.vmem [shape: bf16[8,64], index: 5, kind: input, shape index: {}]
  %s6 = inlined_call_operand.<no memory space> [shape: f32[1], index: 6, kind: input, shape index: {}]
  %s7 = inlined_call_operand.vmem [shape: f32[2,1,256], index: 7, kind: output, shape index: {}]
  %s8 = sld [smem:[#allocation0]]
  $region61: #{model_tanh_forward.1} parent=0
    _
  %s10 = ssub.s32 1, %s8
  %s11 = scalar_select 0, %s10, %s8
  %12 = sst [smem:[#allocation2]] %s6
  loop: start=0, step=1, limit=4
  $region2: #{model_tanh_forward.1} parent=0 // loop_pre_header
    _
  $region3: #{model_tanh_forward.1} parent=0 // loop_header
    %s14 = sphi 0, %s18
    %p15 = scmp.ge.s32.totalorder %s14, 4
    %s21 = sphi 0, %s33
    %s22 = sphi 0, %s29
    %s23 = sphi 0, %s21
    %s24 = sphi 0, %s22
    %s25 = sphi 0, %s23
    %s26 = sphi 0, %s24
    %s38 = sphi 0, %s40
    %s41 = sphi 0, %s38
    %s42 = sphi 0, %s41
    %s58 = sphi 0, %s42
    %s62 = sphi 0, %s62
    %s64 = sphi 0, %s62
    %s65 = sphi 0, %s64
    %s79 = sphi 0, %s65
    %s83 = sphi 0, %s83
    %s85 = sphi 0, %s83
    %s86 = sphi 0, %s85
    %s100 = sphi 0, %s86
    %s104 = sphi 0, %s104
    %s106 = sphi 0, %s104
    %s107 = sphi 0, %s106
    %s121 = sphi 0, %s107
    %s125 = sphi 0, %s125
    %s127 = sphi 0, %s125
    %s128 = sphi 0, %s127
    %s142 = sphi 0, %s128
    %s146 = sphi 0, %s146
    %s148 = sphi 0, %s146
    %s149 = sphi 0, %s148
    %s163 = sphi 0, %s149
    %s167 = sphi 0, %s167
    %s169 = sphi 0, %s167
    %s170 = sphi 0, %s169
    %s184 = sphi 0, %s170
    %s192 = sphi 0, %s194
    %s195 = sphi 0, %s192
    %s196 = sphi 0, %s195
    %s212 = sphi 0, %s196
  $region4: #{model_tanh_forward.1} parent=0 // loop_header_branch
    %17 = sbr.rel (%p15) target = $region8
  $region5: #{model_tanh_forward.1} parent=0 // loop_body
    %s19 = ssub.s32 %s14, 1
    %s20 = ssub.s32 %s14, 2
    %s27 = sadd.s32 1, %s22
    %p28 = scmp.ge.s32.totalorder %s27, 1
    %s29 = scalar_select %p28, 0, %s27
    %s30 = sadd.s32 1, %s21
    %s31 = scalar_select %p28, %s30, %s21
    %p32 = scmp.ge.s32.totalorder %s31, 2
    %s33 = scalar_select %p32, 0, %s31
    %s34 = ssub.s32 %s21, %s33
    %s35 = ssub.s32 %s22, %s29
    %s36 = sor.u32 %s34, %s35
    %p37 = scmp.eq.s32.totalorder %s36, 0
    %s39 = sadd.s32 %s38, 1
    %s40 = scalar_select %p37, %s38, %s39
    %p43 = pneg %p37
    %p44 = scmp.eq.s32.totalorder %s14, 1
    %p45 = por %p43, %p44
    %p46 = scmp.ne.s32.totalorder %s38, %s41
    %p47 = scmp.eq.s32.totalorder %s14, 0
    %p48 = por %p46, %p47
    %p49 = scmp.ne.s32.totalorder %s38, %s41
    %p50 = scmp.eq.s32.totalorder %s19, 1
    %p51 = por %p49, %p50
    %p52 = scmp.ne.s32.totalorder %s41, %s42
    %p53 = scmp.eq.s32.totalorder %s19, 0
    %p54 = por %p52, %p53
    %p55 = scmp.ne.s32.totalorder %s41, %s42
    %p56 = scmp.eq.s32.totalorder %s20, 1
    %p57 = por %p55, %p56
    %p59 = scmp.ne.s32.totalorder %s42, %s58
    %p60 = scmp.eq.s32.totalorder %s20, 0
    %p61 = por %p59, %p60
    %s63 = sadd.s32 %s62, 1
    %p66 = scmp.eq.s32.totalorder %s14, 1
    %p67 = scmp.ne.s32.totalorder %s62, %s64
    %p68 = scmp.eq.s32.totalorder %s14, 0
    %p69 = por %p67, %p68
    %p70 = scmp.ne.s32.totalorder %s62, %s64
    %p71 = scmp.eq.s32.totalorder %s19, 1
    %p72 = por %p70, %p71
    %p73 = scmp.ne.s32.totalorder %s64, %s65
    %p74 = scmp.eq.s32.totalorder %s19, 0
    %p75 = por %p73, %p74
    %p76 = scmp.ne.s32.totalorder %s64, %s65
    %p77 = scmp.eq.s32.totalorder %s20, 1
    %p78 = por %p76, %p77
    %p80 = scmp.ne.s32.totalorder %s65, %s79
    %p81 = scmp.eq.s32.totalorder %s20, 0
    %p82 = por %p80, %p81
    %s84 = sadd.s32 %s83, 1
    %p87 = scmp.eq.s32.totalorder %s14, 1
    %p88 = scmp.ne.s32.totalorder %s83, %s85
    %p89 = scmp.eq.s32.totalorder %s14, 0
    %p90 = por %p88, %p89
    %p91 = scmp.ne.s32.totalorder %s83, %s85
    %p92 = scmp.eq.s32.totalorder %s19, 1
    %p93 = por %p91, %p92
    %p94 = scmp.ne.s32.totalorder %s85, %s86
    %p95 = scmp.eq.s32.totalorder %s19, 0
    %p96 = por %p94, %p95
    %p97 = scmp.ne.s32.totalorder %s85, %s86
    %p98 = scmp.eq.s32.totalorder %s20, 1
    %p99 = por %p97, %p98
    %p101 = scmp.ne.s32.totalorder %s86, %s100
    %p102 = scmp.eq.s32.totalorder %s20, 0
    %p103 = por %p101, %p102
    %s105 = sadd.s32 %s104, 1
    %p108 = scmp.eq.s32.totalorder %s14, 1
    %p109 = scmp.ne.s32.totalorder %s104, %s106
    %p110 = scmp.eq.s32.totalorder %s14, 0
    %p111 = por %p109, %p110
    %p112 = scmp.ne.s32.totalorder %s104, %s106
    %p113 = scmp.eq.s32.totalorder %s19, 1
    %p114 = por %p112, %p113
    %p115 = scmp.ne.s32.totalorder %s106, %s107
    %p116 = scmp.eq.s32.totalorder %s19, 0
    %p117 = por %p115, %p116
    %p118 = scmp.ne.s32.totalorder %s106, %s107
    %p119 = scmp.eq.s32.totalorder %s20, 1
    %p120 = por %p118, %p119
    %p122 = scmp.ne.s32.totalorder %s107, %s121
    %p123 = scmp.eq.s32.totalorder %s20, 0
    %p124 = por %p122, %p123
    %s126 = sadd.s32 %s125, 1
    %p129 = scmp.eq.s32.totalorder %s14, 1
    %p130 = scmp.ne.s32.totalorder %s125, %s127
    %p131 = scmp.eq.s32.totalorder %s14, 0
    %p132 = por %p130, %p131
    %p133 = scmp.ne.s32.totalorder %s125, %s127
    %p134 = scmp.eq.s32.totalorder %s19, 1
    %p135 = por %p133, %p134
    %p136 = scmp.ne.s32.totalorder %s127, %s128
    %p137 = scmp.eq.s32.totalorder %s19, 0
    %p138 = por %p136, %p137
    %p139 = scmp.ne.s32.totalorder %s127, %s128
    %p140 = scmp.eq.s32.totalorder %s20, 1
    %p141 = por %p139, %p140
    %p143 = scmp.ne.s32.totalorder %s128, %s142
    %p144 = scmp.eq.s32.totalorder %s20, 0
    %p145 = por %p143, %p144
    %s147 = sadd.s32 %s146, 1
    %p150 = scmp.eq.s32.totalorder %s14, 1
    %p151 = scmp.ne.s32.totalorder %s146, %s148
    %p152 = scmp.eq.s32.totalorder %s14, 0
    %p153 = por %p151, %p152
    %p154 = scmp.ne.s32.totalorder %s146, %s148
    %p155 = scmp.eq.s32.totalorder %s19, 1
    %p156 = por %p154, %p155
    %p157 = scmp.ne.s32.totalorder %s148, %s149
    %p158 = scmp.eq.s32.totalorder %s19, 0
    %p159 = por %p157, %p158
    %p160 = scmp.ne.s32.totalorder %s148, %s149
    %p161 = scmp.eq.s32.totalorder %s20, 1
    %p162 = por %p160, %p161
    %p164 = scmp.ne.s32.totalorder %s149, %s163
    %p165 = scmp.eq.s32.totalorder %s20, 0
    %p166 = por %p164, %p165
    %s168 = sadd.s32 %s167, 1
    %p171 = scmp.eq.s32.totalorder %s14, 1
    %p172 = scmp.ne.s32.totalorder %s167, %s169
    %p173 = scmp.eq.s32.totalorder %s14, 0
    %p174 = por %p172, %p173
    %p175 = scmp.ne.s32.totalorder %s167, %s169
    %p176 = scmp.eq.s32.totalorder %s19, 1
    %p177 = por %p175, %p176
    %p178 = scmp.ne.s32.totalorder %s169, %s170
    %p179 = scmp.eq.s32.totalorder %s19, 0
    %p180 = por %p178, %p179
    %p181 = scmp.ne.s32.totalorder %s169, %s170
    %p182 = scmp.eq.s32.totalorder %s20, 1
    %p183 = por %p181, %p182
    %p185 = scmp.ne.s32.totalorder %s170, %s184
    %p186 = scmp.eq.s32.totalorder %s20, 0
    %p187 = por %p185, %p186
    %s188 = ssub.s32 %s21, %s33
    %s189 = ssub.s32 %s22, %s29
    %s190 = sor.u32 %s188, %s189
    %p191 = scmp.eq.s32.totalorder %s190, 0
    %s193 = sadd.s32 %s192, 1
    %s194 = scalar_select %p191, %s192, %s193
    %p197 = pneg %p191
    %p198 = scmp.eq.s32.totalorder %s14, 1
    %p199 = por %p197, %p198
    %p200 = scmp.ne.s32.totalorder %s192, %s195
    %p201 = scmp.eq.s32.totalorder %s14, 0
    %p202 = por %p200, %p201
    %p203 = scmp.ne.s32.totalorder %s192, %s195
    %p204 = scmp.eq.s32.totalorder %s19, 1
    %p205 = por %p203, %p204
    %p206 = scmp.ne.s32.totalorder %s195, %s196
    %p207 = scmp.eq.s32.totalorder %s19, 0
    %p208 = por %p206, %p207
    %p209 = scmp.ne.s32.totalorder %s195, %s196
    %p210 = scmp.eq.s32.totalorder %s20, 1
    %p211 = por %p209, %p210
    %p213 = scmp.ne.s32.totalorder %s196, %s212
    %p214 = scmp.eq.s32.totalorder %s20, 0
    %p215 = por %p213, %p214
    %p216 = scmp.le.s32.totalorder 1, %s14
    %p217 = scmp.lt.s32.totalorder %s14, 3
    %p218 = pnand %p216, %p217
    %p219 = pneg %p218
    // Predicated region
    $region9: #{model_tanh_forward.1} parent=5 // pred_check
      _
    $region10: #{model_tanh_forward.1} parent=5 // pred_check_branch
      %221 = sbr.rel (%p218) target = $region12
    $region11: #{model_tanh_forward.1} parent=5 // pred_region
      %s222 = ssub.s32 %s14, 1
      // Predicated region
      $region13: #{model_tanh_forward.1} parent=11 // pred_check
        %p223 = pneg %p75
      $region14: #{model_tanh_forward.1} parent=11 // pred_check_branch
        %225 = sbr.rel (%p223) target = $region16
      $region15: #{model_tanh_forward.1} parent=11 // pred_region
        _
      $region16: #{model_tanh_forward.1} parent=11 // pred_fallthru
        _
      // Predicated region
      $region17: #{model_tanh_forward.1} parent=11 // pred_check
        %p226 = pneg %p96
      $region18: #{model_tanh_forward.1} parent=11 // pred_check_branch
        %228 = sbr.rel (%p226) target = $region20
      $region19: #{model_tanh_forward.1} parent=11 // pred_region
        _
      $region20: #{model_tanh_forward.1} parent=11 // pred_fallthru
        _
      // Predicated region
      $region21: #{model_tanh_forward.1} parent=11 // pred_check
        %p229 = pneg %p117
      $region22: #{model_tanh_forward.1} parent=11 // pred_check_branch
        %231 = sbr.rel (%p229) target = $region24
      $region23: #{model_tanh_forward.1} parent=11 // pred_region
        _
      $region24: #{model_tanh_forward.1} parent=11 // pred_fallthru
        _
      // Predicated region
      $region25: #{model_tanh_forward.1} parent=11 // pred_check
        %p232 = pneg %p138
      $region26: #{model_tanh_forward.1} parent=11 // pred_check_branch
        %234 = sbr.rel (%p232) target = $region28
      $region27: #{model_tanh_forward.1} parent=11 // pred_region
        _
      $region28: #{model_tanh_forward.1} parent=11 // pred_fallthru
        _
      // Predicated region
      $region29: #{model_tanh_forward.1} parent=11 // pred_check
        %p235 = pneg %p159
      $region30: #{model_tanh_forward.1} parent=11 // pred_check_branch
        %237 = sbr.rel (%p235) target = $region32
      $region31: #{model_tanh_forward.1} parent=11 // pred_region
        _
      $region32: #{model_tanh_forward.1} parent=11 // pred_fallthru
        _
      // Predicated region
      $region33: #{model_tanh_forward.1} parent=11 // pred_check
        %p238 = pneg %p180
      $region34: #{model_tanh_forward.1} parent=11 // pred_check_branch
        %240 = sbr.rel (%p238) target = $region36
      $region35: #{model_tanh_forward.1} parent=11 // pred_region
        _
      $region36: #{model_tanh_forward.1} parent=11 // pred_fallthru
        _
    $region12: #{model_tanh_forward.1} parent=5 // pred_fallthru
      _
    %p241 = scmp.lt.s32.totalorder %s14, 2
    // Predicated region
    $region37: #{model_tanh_forward.1} parent=5 // pred_check
      %p242 = pneg %p241
    $region38: #{model_tanh_forward.1} parent=5 // pred_check_branch
      %244 = sbr.rel (%p242) target = $region40
    $region39: #{model_tanh_forward.1} parent=5 // pred_region
      // Predicated region
      $region41: #{model_tanh_forward.1} parent=39 // pred_check
        %p245 = pneg %p48
      $region42: #{model_tanh_forward.1} parent=39 // pred_check_branch
        %247 = sbr.rel (%p245) target = $region44
      $region43: #{model_tanh_forward.1} parent=39 // pred_region
        %s248 = smul.u32 2, %s22
        %p249 = scmp.lt.s32.totalorder %s21, 1
        %s250 = scalar_select %p249, %s21, 1
        %p251 = scmp.lt.s32.totalorder %s248, 1
        %s252 = scalar_select %p251, %s248, 1
        %s253 = smul.addr %s250, 16
        %s254 = sadd.s32 %s252, %s253
        %s255 = smul.addr %s254, 8
        %s256 = scalar_lea.vmem %s0, %s255
        %s257 = smul.u32 2, %s22
      $region44: #{model_tanh_forward.1} parent=39 // pred_fallthru
        _
    $region40: #{model_tanh_forward.1} parent=5 // pred_fallthru
      _
    %p258 = scmp.le.s32.totalorder 1, %s14
    %p259 = scmp.lt.s32.totalorder %s14, 3
    %p260 = pnand %p258, %p259
    %p261 = pneg %p260
    // Predicated region
    $region45: #{model_tanh_forward.1} parent=5 // pred_check
      _
    $region46: #{model_tanh_forward.1} parent=5 // pred_check_branch
      %263 = sbr.rel (%p260) target = $region48
    $region47: #{model_tanh_forward.1} parent=5 // pred_region
      %s264 = ssub.s32 %s14, 1
      %s265 = smul.u32 2, %s24
      %p266 = scmp.lt.s32.totalorder %s23, 1
      %s267 = scalar_select %p266, %s23, 1
      %p268 = scmp.lt.s32.totalorder %s265, 1
      %s269 = scalar_select %p268, %s265, 1
      %s270 = smul.addr %s267, 16
      %s271 = sadd.s32 %s269, %s270
      %s272 = smul.addr %s271, 8
      %s273 = scalar_lea.vmem %s0, %s272
      %p274 = pneg %p54
      %p275 = pneg %p51
      %p276 = pneg %p75
      %p277 = pneg %p72
      %p278 = pneg %p96
      %p279 = pneg %p93
      %p280 = pneg %p117
      %p281 = pneg %p114
      %p282 = pneg %p138
      %p283 = pneg %p135
      %p284 = pneg %p159
      %p285 = pneg %p156
      %p286 = pneg %p180
      %p287 = pneg %p177
      %p288 = pneg %p208
      %p289 = pneg %p205
      %s290 = smul.u32 2, %s24
      %p291 = scmp.lt.s32.totalorder %s23, 1
      %s292 = scalar_select %p291, %s23, 1
      %p293 = scmp.lt.s32.totalorder %s290, 1
      %s294 = scalar_select %p293, %s290, 1
      %s295 = smul.addr %s292, 2
      %s296 = sadd.s32 %s294, %s295
      %s297 = scalar_lea.vmem %s7, %s296
      %s298 = smul.u32 2, %s24
      %p299 = scmp.lt.s32.totalorder %s23, 1
      %s300 = scalar_select %p299, %s23, 1
      %p301 = scmp.lt.s32.totalorder %s298, 1
      %s302 = scalar_select %p301, %s298, 1
      %s303 = smul.addr %s300, 16
      %s304 = sadd.s32 %s302, %s303
      %s305 = smul.addr %s304, 8
      %s306 = scalar_lea.vmem %s0, %s305
      %s307 = smul.u32 2, %s24
      %s308 = smul.u32 2, %s24
      %p309 = scmp.lt.s32.totalorder %s23, 1
      %s310 = scalar_select %p309, %s23, 1
      %p311 = scmp.lt.s32.totalorder %s308, 1
      %s312 = scalar_select %p311, %s308, 1
      %s313 = smul.addr %s310, 2
      %s314 = sadd.s32 %s312, %s313
      %s315 = scalar_lea.vmem %s7, %s314
      %s316 = smul.u32 2, %s24
      %v318 = vld [vmem:[%s306] sm:$0xff]
      %v319 = vld [vmem:[%s306 + $0x8] sm:$0xff]
      %v320 = vld [vmem:[%s306 + $0x10] sm:$0xff]
      %v321 = vld [vmem:[%s306 + $0x18] sm:$0xff]
      %v322 = vld [vmem:[%s306 + $0x20] sm:$0xff]
      %v323 = vld [vmem:[%s306 + $0x28] sm:$0xff]
      %v324 = vld [vmem:[%s306 + $0x30] sm:$0xff]
      %v325 = vld [vmem:[%s306 + $0x38] sm:$0xff]
      %v326 = vld [vmem:[%s306 + $0x40] sm:$0xff]
      %v327 = vld [vmem:[%s306 + $0x48] sm:$0xff]
      %v328 = vld [vmem:[%s306 + $0x50] sm:$0xff]
      %v329 = vld [vmem:[%s306 + $0x58] sm:$0xff]
      %v330 = vld [vmem:[%s306 + $0x60] sm:$0xff]
      %v331 = vld [vmem:[%s306 + $0x68] sm:$0xff]
      %v332 = vld [vmem:[%s306 + $0x70] sm:$0xff]
      %v333 = vld [vmem:[%s306 + $0x78] sm:$0xff]
      %v334 = vpack.c.bf16 %v320, %v318
      %v335 = vpack.c.bf16 %v321, %v319
      %v336 = vpack.c.bf16 %v324, %v322
      %v337 = vpack.c.bf16 %v325, %v323
      %v338 = vpack.c.bf16 %v328, %v326
      %v339 = vpack.c.bf16 %v329, %v327
      %v340 = vpack.c.bf16 %v332, %v330
      %v341 = vpack.c.bf16 %v333, %v331
      %v342 = vld [vmem:[%s1] sm:$0xf]
      %v343 = vld [vmem:[%s1 + $0x4] sm:$0xf]
      %v344 = vld [vmem:[%s1 + $0x8] sm:$0xf]
      %v345 = vld [vmem:[%s1 + $0xc] sm:$0xf]
      %v346 = vld [vmem:[%s1 + $0x10] sm:$0xf]
      %v347 = vld [vmem:[%s1 + $0x14] sm:$0xf]
      %v348 = vld [vmem:[%s1 + $0x18] sm:$0xf]
      %v349 = vld [vmem:[%s1 + $0x1c] sm:$0xf]
      %v350 = vld [vmem:[%s2] sm:$0xff]
      %v351 = vld [vmem:[%s2 + $0x8] sm:$0xff]
      %v352 = vld [vmem:[%s2 + $0x10] sm:$0xff]
      %v353 = vld [vmem:[%s2 + $0x18] sm:$0xff]
      %v354 = vld [vmem:[%s2 + $0x20] sm:$0xff]
      %v355 = vld [vmem:[%s2 + $0x28] sm:$0xff]
      %v356 = vld [vmem:[%s2 + $0x30] sm:$0xff]
      %v357 = vld [vmem:[%s2 + $0x38] sm:$0xff]
      %359 = vset.pattern.permute.xlu0 0
      %360 = vperm.xlu0 %359, %v350
      %v361 = vpop.permute.xlu0 %360
      %364 = vset.pattern.permute.xlu0 0
      %365 = vperm.xlu0 %364, %v351
      %v366 = vpop.permute.xlu0 %365
      %369 = vset.pattern.permute.xlu0 0
      %370 = vperm.xlu0 %369, %v352
      %v371 = vpop.permute.xlu0 %370
      %374 = vset.pattern.permute.xlu0 0
      %375 = vperm.xlu0 %374, %v353
      %v376 = vpop.permute.xlu0 %375
      %379 = vset.pattern.permute.xlu0 0
      %380 = vperm.xlu0 %379, %v354
      %v381 = vpop.permute.xlu0 %380
      %384 = vset.pattern.permute.xlu0 0
      %385 = vperm.xlu0 %384, %v355
      %v386 = vpop.permute.xlu0 %385
      %389 = vset.pattern.permute.xlu0 0
      %390 = vperm.xlu0 %389, %v356
      %v391 = vpop.permute.xlu0 %390
      %394 = vset.pattern.permute.xlu0 0
      %395 = vperm.xlu0 %394, %v357
      %v396 = vpop.permute.xlu0 %395
      %v406 = vunpack.c.l.b16 %v342
      %v407 = vunpack.c.l.b16 %v343
      %v408 = vunpack.c.l.b16 %v344
      %v409 = vunpack.c.l.b16 %v345
      %v410 = vunpack.c.l.b16 %v346
      %v411 = vunpack.c.l.b16 %v347
      %v412 = vunpack.c.l.b16 %v348
      %v413 = vunpack.c.l.b16 %v349
      %v414 = vpack.c.b16 %v407, %v406
      %v415 = vpack.c.b16 %v409, %v408
      %v416 = vpack.c.b16 %v411, %v410
      %v417 = vpack.c.b16 %v413, %v412
      %vm418 = vcmask 523264
      %v420 = vsel %vm418, %v414, 0
      %v423 = vsel %vm418, %v415, 0
      %v426 = vsel %vm418, %v416, 0
      %v429 = vsel %vm418, %v417, 0
      %431 = vmatprep.subr.bf16.mxu0 %v335
      %432 = vmatpush1.bf16.msra.mxu0 %v334
      %433 = vmatprep.subr.bf16.mxu0 %v337
      %434 = vmatpush1.bf16.msra.mxu0 %v336
      %435 = vmatprep.subr.bf16.mxu0 %v339
      %436 = vmatpush1.bf16.msra.mxu0 %v338
      %437 = vmatprep.subr.bf16.mxu0 %v341
      %438 = vmatpush1.bf16.msra.mxu0 %v340
      %439 = vmatprep.subr.bf16.mxu0 0
      %440 = vmatpush1.bf16.msra.mxu0 0
      %441 = vmatprep.subr.bf16.mxu0 0
      %442 = vmatpush1.bf16.msra.mxu0 0
      %443 = vmatprep.subr.bf16.mxu0 0
      %444 = vmatpush1.bf16.msra.mxu0 0
      %445 = vmatprep.subr.bf16.mxu0 0
      %446 = vmatpush1.bf16.msra.mxu0 0
      %447 = vmatprep.subr.bf16.mxu0 0
      %448 = vmatpush1.bf16.msra.mxu0 0
      %449 = vmatprep.subr.bf16.mxu0 0
      %450 = vmatpush1.bf16.msra.mxu0 0
      %451 = vmatprep.subr.bf16.mxu0 0
      %452 = vmatpush1.bf16.msra.mxu0 0
      %453 = vmatprep.subr.bf16.mxu0 0
      %454 = vmatpush1.bf16.msra.mxu0 0
      %455 = vmatprep.subr.bf16.mxu0 0
      %456 = vmatpush1.bf16.msra.mxu0 0
      %457 = vmatprep.subr.bf16.mxu0 0
      %458 = vmatpush1.bf16.msra.mxu0 0
      %459 = vmatprep.subr.bf16.mxu0 0
      %460 = vmatpush1.bf16.msra.mxu0 0
      %461 = vmatprep.subr.bf16.mxu0 0
      %462 = vmatpush1.bf16.msra.mxu0 0
      %463 = vmatprep.mubr.bf16.mxu0 0
      %464 = vmatmul.mubr.bf16.gmra.mrb[0].mxu0 %v420
      %v465 = vpop.f32.mrb[0].mxu0
      %v466 = vadd.f32 %v361, %v465
      %v467 = vpop.f32.mrb[0].mxu0
      %v468 = vadd.f32 %v361, %v467
      %v469 = vpop.f32.mrb[0].mxu0
      %v470 = vadd.f32 %v366, %v469
      %v471 = vpop.f32.mrb[0].mxu0
      %v472 = vadd.f32 %v366, %v471
      %473 = vmatprep.mubr.bf16.mxu0 0
      %474 = vmatmul.mubr.bf16.gmra.mrb[0].mxu0 %v423
      %v475 = vpop.f32.mrb[0].mxu0
      %v476 = vadd.f32 %v371, %v475
      %v477 = vpop.f32.mrb[0].mxu0
      %v478 = vadd.f32 %v371, %v477
      %v479 = vpop.f32.mrb[0].mxu0
      %v480 = vadd.f32 %v376, %v479
      %v481 = vpop.f32.mrb[0].mxu0
      %v482 = vadd.f32 %v376, %v481
      %483 = vmatprep.mubr.bf16.mxu0 0
      %484 = vmatmul.mubr.bf16.gmra.mrb[0].mxu0 %v426
      %v485 = vpop.f32.mrb[0].mxu0
      %v486 = vadd.f32 %v381, %v485
      %v487 = vpop.f32.mrb[0].mxu0
      %v488 = vadd.f32 %v381, %v487
      %v489 = vpop.f32.mrb[0].mxu0
      %v490 = vadd.f32 %v386, %v489
      %v491 = vpop.f32.mrb[0].mxu0
      %v492 = vadd.f32 %v386, %v491
      %493 = vmatprep.mubr.bf16.mxu0 0
      %494 = vmatmul.mubr.bf16.gmra.mrb[0].mxu0 %v429
      %v495 = vpop.f32.mrb[0].mxu0
      %v496 = vadd.f32 %v391, %v495
      %v497 = vpop.f32.mrb[0].mxu0
      %v498 = vadd.f32 %v391, %v497
      %v499 = vpop.f32.mrb[0].mxu0
      %v500 = vadd.f32 %v396, %v499
      %v501 = vpop.f32.mrb[0].mxu0
      %v502 = vadd.f32 %v396, %v501
      %503 = vdwg.mxu0
      %v504 = vtanh.pop %v466
      %v505 = vtanh.pop %v468
      %v506 = vtanh.pop %v470
      %v507 = vtanh.pop %v472
      %v508 = vtanh.pop %v476
      %v509 = vtanh.pop %v478
      %v510 = vtanh.pop %v480
      %v511 = vtanh.pop %v482
      %v512 = vtanh.pop %v486
      %v513 = vtanh.pop %v488
      %v514 = vtanh.pop %v490
      %v515 = vtanh.pop %v492
      %v516 = vtanh.pop %v496
      %v517 = vtanh.pop %v498
      %v518 = vtanh.pop %v500
      %v519 = vtanh.pop %v502
      %v520 = vpack.c.bf16 %v506, %v504
      %v521 = vpack.c.bf16 %v507, %v505
      %v522 = vpack.c.bf16 %v510, %v508
      %v523 = vpack.c.bf16 %v511, %v509
      %v524 = vpack.c.bf16 %v514, %v512
      %v525 = vpack.c.bf16 %v515, %v513
      %v526 = vpack.c.bf16 %v518, %v516
      %v527 = vpack.c.bf16 %v519, %v517
      %v528 = vld [vmem:[%s3] sm:$0xf]
      %v529 = vld [vmem:[%s3 + $0x4] sm:$0xf]
      %v530 = vld [vmem:[%s3 + $0x8] sm:$0xf]
      %v531 = vld [vmem:[%s3 + $0xc] sm:$0xf]
      %v532 = vld [vmem:[%s3 + $0x10] sm:$0xf]
      %v533 = vld [vmem:[%s3 + $0x14] sm:$0xf]
      %v534 = vld [vmem:[%s3 + $0x18] sm:$0xf]
      %v535 = vld [vmem:[%s3 + $0x1c] sm:$0xf]
      %v536 = vld [vmem:[%s4] sm:$0xff]
      %v537 = vld [vmem:[%s4 + $0x8] sm:$0xff]
      %v538 = vld [vmem:[%s4 + $0x10] sm:$0xff]
      %v539 = vld [vmem:[%s4 + $0x18] sm:$0xff]
      %v540 = vld [vmem:[%s4 + $0x20] sm:$0xff]
      %v541 = vld [vmem:[%s4 + $0x28] sm:$0xff]
      %v542 = vld [vmem:[%s4 + $0x30] sm:$0xff]
      %v543 = vld [vmem:[%s4 + $0x38] sm:$0xff]
      %545 = vset.pattern.permute.xlu0 0
      %546 = vperm.xlu0 %545, %v536
      %v547 = vpop.permute.xlu0 %546
      %550 = vset.pattern.permute.xlu0 0
      %551 = vperm.xlu0 %550, %v537
      %v552 = vpop.permute.xlu0 %551
      %555 = vset.pattern.permute.xlu0 0
      %556 = vperm.xlu0 %555, %v538
      %v557 = vpop.permute.xlu0 %556
      %560 = vset.pattern.permute.xlu0 0
      %561 = vperm.xlu0 %560, %v539
      %v562 = vpop.permute.xlu0 %561
      %565 = vset.pattern.permute.xlu0 0
      %566 = vperm.xlu0 %565, %v540
      %v567 = vpop.permute.xlu0 %566
      %570 = vset.pattern.permute.xlu0 0
      %571 = vperm.xlu0 %570, %v541
      %v572 = vpop.permute.xlu0 %571
      %575 = vset.pattern.permute.xlu0 0
      %576 = vperm.xlu0 %575, %v542
      %v577 = vpop.permute.xlu0 %576
      %580 = vset.pattern.permute.xlu0 0
      %581 = vperm.xlu0 %580, %v543
      %v582 = vpop.permute.xlu0 %581
      %v592 = vunpack.c.l.b16 %v528
      %v593 = vunpack.c.l.b16 %v529
      %v594 = vunpack.c.l.b16 %v530
      %v595 = vunpack.c.l.b16 %v531
      %v596 = vunpack.c.l.b16 %v532
      %v597 = vunpack.c.l.b16 %v533
      %v598 = vunpack.c.l.b16 %v534
      %v599 = vunpack.c.l.b16 %v535
      %v600 = vpack.c.b16 %v593, %v592
      %v601 = vpack.c.b16 %v595, %v594
      %v602 = vpack.c.b16 %v597, %v596
      %v603 = vpack.c.b16 %v599, %v598
      %v605 = vsel %vm418, %v600, 0
      %v608 = vsel %vm418, %v601, 0
      %v611 = vsel %vm418, %v602, 0
      %v614 = vsel %vm418, %v603, 0
      %616 = vmatprep.subr.bf16.mxu0 %v521
      %617 = vmatpush1.bf16.msra.mxu0 %v520
      %618 = vmatprep.subr.bf16.mxu0 %v523
      %619 = vmatpush1.bf16.msra.mxu0 %v522
      %620 = vmatprep.subr.bf16.mxu0 %v525
      %621 = vmatpush1.bf16.msra.mxu0 %v524
      %622 = vmatprep.subr.bf16.mxu0 %v527
      %623 = vmatpush1.bf16.msra.mxu0 %v526
      %624 = vmatprep.subr.bf16.mxu0 0
      %625 = vmatpush1.bf16.msra.mxu0 0
      %626 = vmatprep.subr.bf16.mxu0 0
      %627 = vmatpush1.bf16.msra.mxu0 0
      %628 = vmatprep.subr.bf16.mxu0 0
      %629 = vmatpush1.bf16.msra.mxu0 0
      %630 = vmatprep.subr.bf16.mxu0 0
      %631 = vmatpush1.bf16.msra.mxu0 0
      %632 = vmatprep.subr.bf16.mxu0 0
      %633 = vmatpush1.bf16.msra.mxu0 0
      %634 = vmatprep.subr.bf16.mxu0 0
      %635 = vmatpush1.bf16.msra.mxu0 0
      %636 = vmatprep.subr.bf16.mxu0 0
      %637 = vmatpush1.bf16.msra.mxu0 0
      %638 = vmatprep.subr.bf16.mxu0 0
      %639 = vmatpush1.bf16.msra.mxu0 0
      %640 = vmatprep.subr.bf16.mxu0 0
      %641 = vmatpush1.bf16.msra.mxu0 0
      %642 = vmatprep.subr.bf16.mxu0 0
      %643 = vmatpush1.bf16.msra.mxu0 0
      %644 = vmatprep.subr.bf16.mxu0 0
      %645 = vmatpush1.bf16.msra.mxu0 0
      %646 = vmatprep.subr.bf16.mxu0 0
      %647 = vmatpush1.bf16.msra.mxu0 0
      %648 = vmatprep.mubr.bf16.mxu0 0
      %649 = vmatmul.mubr.bf16.gmra.mrb[0].mxu0 %v605
      %v650 = vpop.f32.mrb[0].mxu0
      %v651 = vadd.f32 %v547, %v650
      %v652 = vpop.f32.mrb[0].mxu0
      %v653 = vadd.f32 %v547, %v652
      %v654 = vpop.f32.mrb[0].mxu0
      %v655 = vadd.f32 %v552, %v654
      %v656 = vpop.f32.mrb[0].mxu0
      %v657 = vadd.f32 %v552, %v656
      %658 = vmatprep.mubr.bf16.mxu0 0
      %659 = vmatmul.mubr.bf16.gmra.mrb[0].mxu0 %v608
      %v660 = vpop.f32.mrb[0].mxu0
      %v661 = vadd.f32 %v557, %v660
      %v662 = vpop.f32.mrb[0].mxu0
      %v663 = vadd.f32 %v557, %v662
      %v664 = vpop.f32.mrb[0].mxu0
      %v665 = vadd.f32 %v562, %v664
      %v666 = vpop.f32.mrb[0].mxu0
      %v667 = vadd.f32 %v562, %v666
      %668 = vmatprep.mubr.bf16.mxu0 0
      %669 = vmatmul.mubr.bf16.gmra.mrb[0].mxu0 %v611
      %v670 = vpop.f32.mrb[0].mxu0
      %v671 = vadd.f32 %v567, %v670
      %v672 = vpop.f32.mrb[0].mxu0
      %v673 = vadd.f32 %v567, %v672
      %v674 = vpop.f32.mrb[0].mxu0
      %v675 = vadd.f32 %v572, %v674
      %v676 = vpop.f32.mrb[0].mxu0
      %v677 = vadd.f32 %v572, %v676
      %678 = vmatprep.mubr.bf16.mxu0 0
      %679 = vmatmul.mubr.bf16.gmra.mrb[0].mxu0 %v614
      %v680 = vpop.f32.mrb[0].mxu0
      %v681 = vadd.f32 %v577, %v680
      %v682 = vpop.f32.mrb[0].mxu0
      %v683 = vadd.f32 %v577, %v682
      %v684 = vpop.f32.mrb[0].mxu0
      %v685 = vadd.f32 %v582, %v684
      %v686 = vpop.f32.mrb[0].mxu0
      %v687 = vadd.f32 %v582, %v686
      %688 = vdwg.mxu0
      %v689 = vtanh.pop %v651
      %v690 = vtanh.pop %v653
      %v691 = vtanh.pop %v655
      %v692 = vtanh.pop %v657
      %v693 = vtanh.pop %v661
      %v694 = vtanh.pop %v663
      %v695 = vtanh.pop %v665
      %v696 = vtanh.pop %v667
      %v697 = vtanh.pop %v671
      %v698 = vtanh.pop %v673
      %v699 = vtanh.pop %v675
      %v700 = vtanh.pop %v677
      %v701 = vtanh.pop %v681
      %v702 = vtanh.pop %v683
      %v703 = vtanh.pop %v685
      %v704 = vtanh.pop %v687
      %v705 = vpack.c.bf16 %v691, %v689
      %v706 = vpack.c.bf16 %v692, %v690
      %v707 = vpack.c.bf16 %v695, %v693
      %v708 = vpack.c.bf16 %v696, %v694
      %v709 = vpack.c.bf16 %v699, %v697
      %v710 = vpack.c.bf16 %v700, %v698
      %v711 = vpack.c.bf16 %v703, %v701
      %v712 = vpack.c.bf16 %v704, %v702
      %v713 = vld [vmem:[%s5] sm:$0xf]
      %v715 = vsel %vm418, %v713, 0
      %717 = vmatprep.subr.bf16.mxu0 %v706
      %718 = vmatpush1.bf16.msra.mxu0 %v705
      %719 = vmatprep.subr.bf16.mxu0 %v708
      %720 = vmatpush1.bf16.msra.mxu0 %v707
      %721 = vmatprep.subr.bf16.mxu0 %v710
      %722 = vmatpush1.bf16.msra.mxu0 %v709
      %723 = vmatprep.subr.bf16.mxu0 %v712
      %724 = vmatpush1.bf16.msra.mxu0 %v711
      %725 = vmatprep.subr.bf16.mxu0 0
      %726 = vmatpush1.bf16.msra.mxu0 0
      %727 = vmatprep.subr.bf16.mxu0 0
      %728 = vmatpush1.bf16.msra.mxu0 0
      %729 = vmatprep.subr.bf16.mxu0 0
      %730 = vmatpush1.bf16.msra.mxu0 0
      %731 = vmatprep.subr.bf16.mxu0 0
      %732 = vmatpush1.bf16.msra.mxu0 0
      %733 = vmatprep.subr.bf16.mxu0 0
      %734 = vmatpush1.bf16.msra.mxu0 0
      %735 = vmatprep.subr.bf16.mxu0 0
      %736 = vmatpush1.bf16.msra.mxu0 0
      %737 = vmatprep.subr.bf16.mxu0 0
      %738 = vmatpush1.bf16.msra.mxu0 0
      %739 = vmatprep.subr.bf16.mxu0 0
      %740 = vmatpush1.bf16.msra.mxu0 0
      %741 = vmatprep.subr.bf16.mxu0 0
      %742 = vmatpush1.bf16.msra.mxu0 0
      %743 = vmatprep.subr.bf16.mxu0 0
      %744 = vmatpush1.bf16.msra.mxu0 0
      %745 = vmatprep.subr.bf16.mxu0 0
      %746 = vmatpush1.bf16.msra.mxu0 0
      %747 = vmatprep.subr.bf16.mxu0 0
      %748 = vmatpush1.bf16.msra.mxu0 0
      %749 = vmatprep.mubr.bf16.mxu0 0
      %750 = vmatmul.mubr.bf16.gmra.mrb[0].mxu0 %v715
      %v751 = vpop.f32.mrb[0].mxu0
      %v752 = vadd.f32 0.0, %v751
      %v753 = vpop.f32.mrb[0].mxu0
      %v754 = vadd.f32 0.0, %v753
      %v755 = vpop.f32.mrb[0].mxu0
      %v756 = vpop.f32.mrb[0].mxu0
      %757 = vdwg.mxu0
      %s758 = sld [smem:[#allocation2]]
      %v759 = vstv %s758
      %v760 = vadd.f32 %v752, %v759
      %v761 = vadd.f32 %v754, %v759
      %v762 = vtanh.pop %v760
      %v763 = vtanh.pop %v761
      %v766 = vcombine.low %v762, %v763
      %v768 = vunpack.c.l.s4 1966171168
      %v769 = vunpack.c.0.s8 %v768
      %v770 = vlaneseq
      %v771 = vshrl.u32 %v770, 7
      %v772 = vsub.s32 %v769, %v771
      %v773 = vrot.slane %v766, %v772
      %v775 = vunpack.c.l.s4 1966171168
      %v776 = vunpack.c.0.s8 %v775
      %v777 = vlaneseq
      %v778 = vshrl.u32 %v777, 7
      %v779 = vsub.s32 %v776, %v778
      %v780 = vrot.slane %v773, %v779
      %v782 = vlaneseq
      %vm783 = vcmp.ge.s32.totalorder %v782, 0
      %vm784 = vcmp.lt.s32.totalorder %v782, 256
      %vm785 = vmand %vm783, %vm784
      %786 = vst.msk [vmem:[%s315] sm:$0x3] %vm785, %v780
      %s787 = smul.u32 2, %s24
      %p788 = scmp.lt.s32.totalorder %s23, 1
      %s789 = scalar_select %p788, %s23, 1
      %p790 = scmp.lt.s32.totalorder %s787, 1
      %s791 = scalar_select %p790, %s787, 1
      %s792 = smul.addr %s789, 2
      %s793 = sadd.s32 %s791, %s792
      %s794 = scalar_lea.vmem %s7, %s793
      // Predicated region
      $region49: #{model_tanh_forward.1} parent=47 // pred_check
        %p795 = pneg %p205
      $region50: #{model_tanh_forward.1} parent=47 // pred_check_branch
        %797 = sbr.rel (%p795) target = $region52
      $region51: #{model_tanh_forward.1} parent=47 // pred_region
        %s798 = smul.u32 2, %s24
      $region52: #{model_tanh_forward.1} parent=47 // pred_fallthru
        _
    $region48: #{model_tanh_forward.1} parent=5 // pred_fallthru
      _
    %p799 = scmp.le.s32.totalorder 2, %s14
    // Predicated region
    $region53: #{model_tanh_forward.1} parent=5 // pred_check
      %p800 = pneg %p799
    $region54: #{model_tanh_forward.1} parent=5 // pred_check_branch
      %802 = sbr.rel (%p800) target = $region56
    $region55: #{model_tanh_forward.1} parent=5 // pred_region
      %s803 = ssub.s32 %s14, 2
      // Predicated region
      $region57: #{model_tanh_forward.1} parent=55 // pred_check
        %p804 = pneg %p211
      $region58: #{model_tanh_forward.1} parent=55 // pred_check_branch
        %806 = sbr.rel (%p804) target = $region60
      $region59: #{model_tanh_forward.1} parent=55 // pred_region
        %s807 = smul.u32 2, %s26
        %p808 = scmp.lt.s32.totalorder %s25, 1
        %s809 = scalar_select %p808, %s25, 1
        %p810 = scmp.lt.s32.totalorder %s807, 1
        %s811 = scalar_select %p810, %s807, 1
        %s812 = smul.addr %s809, 2
        %s813 = sadd.s32 %s811, %s812
        %s814 = scalar_lea.vmem %s7, %s813
      $region60: #{model_tanh_forward.1} parent=55 // pred_fallthru
        _
    $region56: #{model_tanh_forward.1} parent=5 // pred_fallthru
      _
  $region6: #{model_tanh_forward.1} parent=0 // loop_footer
    %s18 = sadd.s32 1, %s14
  $region7: #{model_tanh_forward.1} parent=0 // loop_footer_branch
    %13 = sbr.rel target = $region3
  $region8: #{model_tanh_forward.1} parent=0 // loop_exit
    _

</llo_original>
